<compile_context>
chip_gen: v7x
topology: tpu7x:2x2x1
jax: 0.10.0
libtpu: 0.0.40
codegen_flags: <defaults>
</compile_context>

<pallas_src>
import jax
import jax.numpy as jnp
from jax.experimental import pallas as pl
from jax.experimental.pallas import tpu as pltpu


def _round_up(x, m):
    return ((x + m - 1) // m) * m


def _padded_vmem_bytes(rows, cols, itemsize):
    """VMEM bytes of one (rows, cols) block after (sublane, lane) tile padding."""
    sub = max(8, 32 // itemsize)  # 8 sublanes for f32, 16 for bf16, 32 for int8
    return _round_up(rows, sub) * _round_up(cols, 128) * itemsize


def _batch_tile(B, row_cols, itemsize, x_block_budget_bytes):
    """Batch-tile size for the (B, row_cols) x operand.

    Budgets against the padded VMEM layout with double buffering, never
    requires tb to divide B (Pallas masks the ragged last block), and caps the
    tile so large batches get >= 2 grid steps (megacore / v7x second core).
    """
    sub = max(8, 32 // itemsize)
    bytes_per_row = _round_up(row_cols, 128) * itemsize
    max_rows = x_block_budget_bytes // (2 * bytes_per_row)  # 2x: double buffer
    max_rows = max(sub, (max_rows // sub) * sub)
    if B <= max_rows and B <= 2 * sub:
        return B  # tiny batch: one full-batch block (full-dim block is legal)
    half = _round_up(-(-B // 2), sub)  # >= 2 grid steps when B is big enough
    tb = min(max_rows, half, _round_up(B, sub))
    return max(tb, sub)


def _make_kernel(ts):
    def kernel(x_ref, w1_ref, b1_ref, w2b_ref, o_ref):
        # x_ref  : (tb, ts*d)     VMEM, lane-dense, streamed over batch
        # w1_ref : (ts*d, ts)     VMEM, block-diagonal fold of Linear(d_model, 1)
        # b1_ref : (1,)           SMEM scalar
        # w2b_ref: (ts+1, n_emo)  VMEM, rows[:ts] = W2^T, row[ts] = b2
        # o_ref  : (tb, n_emo)    VMEM
        x = x_ref[...].astype(jnp.float32)

        # ---- Linear(d_model -> 1) over all timesteps at once (MXU matmul) ----
        h = jnp.dot(x, w1_ref[...], preferred_element_type=jnp.float32)  # (tb, ts)

        # ---- + bias, ReLU; Dropout is identity at inference ----
        # TODO(synk): training-mode dropout (mask + 1/(1-p) scaling) not implemented.
        h = jnp.maximum(h + b1_ref[0], 0.0)

        # ---- Linear(ts_steps -> n_emotions): one dot, bias from packed operand ----
        w2 = w2b_ref[pl.ds(0, ts), :]   # (ts, n_emo)
        b2 = w2b_ref[pl.ds(ts, 1), :]   # (1, n_emo)
        out = jnp.dot(h, w2, preferred_element_type=jnp.float32) + b2
        o_ref[...] = out.astype(o_ref.dtype)

    return kernel


def emotion_decoder(x, w1, b1, w2, b2, *, x_block_budget_bytes=8 * 1024 * 1024):
    """
    x : (B, ts_steps, d_model)   float32 or bfloat16
    w1: (1, d_model)             Linear(d_model, 1).weight   (PyTorch layout)
    b1: (1,)                     Linear(d_model, 1).bias
    w2: (n_emotions, ts_steps)   Linear(ts_steps, n_emotions).weight
    b2: (n_emotions,)            Linear(ts_steps, n_emotions).bias
    returns (B, n_emotions) float32
    """
    B, ts, d = x.shape
    n_emo = w2.shape[0]

    # ---- host-side layout plumbing (free / one-time tiny XLA ops) ----
    x_flat = x.reshape(B, ts * d)  # contiguous row-major reshape: no copy
    # Block-diagonal fold: w1_blk[t*d + i, t] = w1[0, i].
    w1_blk = jnp.kron(jnp.eye(ts, dtype=jnp.float32),
                      w1.reshape(d, 1).astype(jnp.float32))         # (ts*d, ts)
    # TODO(synk): for very large ts^2*d the block-diagonal weight grows quadratically
    # in ts; in that regime a two-stage (non-folded) kernel would be preferable.
    b1_arg = b1.reshape(1).astype(jnp.float32)                      # SMEM scalar
    w2b = jnp.concatenate([w2.T.astype(jnp.float32),
                           b2.reshape(1, n_emo).astype(jnp.float32)], axis=0)

    # ---- tiling / VMEM accounting against the padded layout ----
    tb = _batch_tile(B, ts * d, x.dtype.itemsize, x_block_budget_bytes)
    num_tiles = pl.cdiv(B, tb)

    vmem_need = (
        2 * _padded_vmem_bytes(tb, ts * d, x.dtype.itemsize)   # x (double-buffered)
        + 2 * _padded_vmem_bytes(tb, n_emo, 4)                 # out
        + 2 * _padded_vmem_bytes(ts * d, ts, 4)                # w1_blk (resident)
        + 2 * _padded_vmem_bytes(ts + 1, n_emo, 4)             # w2 + b2 (resident)
    )
    vmem_limit = min(int(vmem_need * 3 // 2) + (2 << 20), 64 * 1024 * 1024)

    kernel = _make_kernel(ts)

    return pl.pallas_call(
        kernel,
        out_shape=jax.ShapeDtypeStruct((B, n_emo), jnp.float32),
        grid=(num_tiles,),
        in_specs=[
            pl.BlockSpec((tb, ts * d), lambda i: (i, 0)),        # x: streamed over batch
            pl.BlockSpec((ts * d, ts), lambda i: (0, 0)),        # w1_blk: resident
            pl.BlockSpec(memory_space=pltpu.MemorySpace.SMEM),   # b1: SMEM scalar
            pl.BlockSpec((ts + 1, n_emo), lambda i: (0, 0)),     # w2^T + b2: resident
        ],
        out_specs=pl.BlockSpec((tb, n_emo), lambda i: (i, 0)),
        compiler_params=pltpu.CompilerParams(
            dimension_semantics=("parallel",),        # megacore / both TCs on v7x
            vmem_limit_bytes=vmem_limit),
    )(x_flat, w1_blk, b1_arg, w2b)


def init_params(key, d_model, ts_steps, n_emotions):
    """PyTorch nn.Linear default init: U(-1/sqrt(fan_in), +1/sqrt(fan_in))."""
    k1, k2, k3, k4 = jax.random.split(key, 4)
    bound1 = 1.0 / jnp.sqrt(d_model)
    bound2 = 1.0 / jnp.sqrt(ts_steps)
    w1 = jax.random.uniform(k1, (1, d_model), jnp.float32, -bound1, bound1)
    b1 = jax.random.uniform(k2, (1,), jnp.float32, -bound1, bound1)
    w2 = jax.random.uniform(k3, (n_emotions, ts_steps), jnp.float32, -bound2, bound2)
    b2 = jax.random.uniform(k4, (n_emotions,), jnp.float32, -bound2, bound2)
    return w1, b1, w2, b2


def reference(x, w1, b1, w2, b2):
    """Exact-f32 reference (no matmul precision ambiguity)."""
    xf = x.astype(jnp.float32)
    h = jnp.maximum(jnp.sum(xf * w1[0], axis=-1) + b1[0], 0.0)        # (B, ts)
    return jnp.sum(h[:, None, :] * w2[None, :, :], axis=-1) + b2      # (B, n_emo)


if __name__ == "__main__":
    B, ts_steps, d_model, n_emotions = 2, 8, 32, 4

    key = jax.random.PRNGKey(0)
    kx, kp = jax.random.split(key)
    x = jax.random.normal(kx, (B, ts_steps, d_model), jnp.float32)
    w1, b1, w2, b2 = init_params(kp, d_model, ts_steps, n_emotions)

    out = jax.block_until_ready(emotion_decoder(x, w1, b1, w2, b2))

    ref = reference(x, w1, b1, w2, b2)
    assert out.shape == (B, n_emotions)
    assert jnp.allclose(out, ref, atol=1e-4, rtol=1e-4), "mismatch vs reference"

    print("KERNEL_OK")
</pallas_src>

<mosaic_0001>
module attributes {stable_mosaic.version = 11 : i64} {
  func.func @kernel(%arg0: i32, %arg1: memref<2x256xf32, #tpu.memory_space<vmem>>, %arg2: memref<256x8xf32, #tpu.memory_space<vmem>>, %arg3: memref<1xf32, #tpu.memory_space<smem>>, %arg4: memref<9x4xf32, #tpu.memory_space<vmem>>, %arg5: memref<2x4xf32, #tpu.memory_space<vmem>>) attributes {dimension_semantics = [#tpu.dimension_semantics<parallel>], iteration_bounds = array<i64: 1>, scalar_prefetch = 0 : i64, scratch_operands = 0 : i64, tpu.core_type = #tpu.core_type<tc>, window_params = [{transform_indices = @transform_0, window_bounds = array<i64: 2, 256>}, {pipeline_mode = #tpu.pipeline_mode<synchronous>, transform_indices = @transform_1, window_bounds = array<i64: 256, 8>}, {transform_indices = @transform_2, window_bounds = array<i64: 1>}, {pipeline_mode = #tpu.pipeline_mode<synchronous>, transform_indices = @transform_3, window_bounds = array<i64: 9, 4>}, {transform_indices = @transform_4, window_bounds = array<i64: 2, 4>}]} {
    %c0 = arith.constant 0 : index
    %c0_0 = arith.constant 0 : index
    %0 = vector.load %arg1[%c0, %c0_0] : memref<2x256xf32, #tpu.memory_space<vmem>>, vector<2x256xf32>
    %c0_1 = arith.constant 0 : index
    %c0_2 = arith.constant 0 : index
    %1 = vector.load %arg2[%c0_1, %c0_2] : memref<256x8xf32, #tpu.memory_space<vmem>>, vector<256x8xf32>
    %cst = arith.constant dense<0.000000e+00> : vector<2x8xf32>
    %2 = tpu.matmul %0, %1, %cst {dimension_numbers = #tpu.dot_dimension_numbers<[1], [0], [0], [1], [0, 0, 1, 1], [], []>} : vector<2x256xf32>, vector<256x8xf32>, vector<2x8xf32> -> vector<2x8xf32>
    %c0_3 = arith.constant 0 : index
    %3 = memref.load %arg3[%c0_3] : memref<1xf32, #tpu.memory_space<smem>>
    %4 = vector.broadcast %3 : f32 to vector<2x8xf32>
    %5 = arith.addf %2, %4 : vector<2x8xf32>
    %cst_4 = arith.constant 0.000000e+00 : f32
    %6 = vector.broadcast %cst_4 : f32 to vector<2x8xf32>
    %7 = arith.maximumf %5, %6 : vector<2x8xf32>
    %c0_5 = arith.constant 0 : index
    %c0_6 = arith.constant 0 : index
    %8 = vector.load %arg4[%c0_5, %c0_6] : memref<9x4xf32, #tpu.memory_space<vmem>>, vector<8x4xf32>
    %c8 = arith.constant 8 : index
    %c0_7 = arith.constant 0 : index
    %9 = vector.load %arg4[%c8, %c0_7] : memref<9x4xf32, #tpu.memory_space<vmem>>, vector<1x4xf32>
    %cst_8 = arith.constant dense<0.000000e+00> : vector<2x4xf32>
    %10 = tpu.matmul %7, %8, %cst_8 {dimension_numbers = #tpu.dot_dimension_numbers<[1], [0], [0], [1], [0, 0, 1, 1], [], []>} : vector<2x8xf32>, vector<8x4xf32>, vector<2x4xf32> -> vector<2x4xf32>
    %11 = vector.broadcast %9 : vector<1x4xf32> to vector<2x4xf32>
    %12 = arith.addf %10, %11 : vector<2x4xf32>
    %c0_9 = arith.constant 0 : index
    %c0_10 = arith.constant 0 : index
    %13 = vector.load %arg5[%c0_9, %c0_10] : memref<2x4xf32, #tpu.memory_space<vmem>>, vector<2x4xf32>
    tpu.vector_store %arg5[%c0_9, %c0_10], %12 {strides = array<i32>} : memref<2x4xf32, #tpu.memory_space<vmem>>, vector<2x4xf32>,
    return
  }
  func.func @transform_0(%arg0: i32) -> (i32, i32) {
    %c0_i32 = arith.constant 0 : i32
    %c0_i32_0 = arith.constant 0 : i32
    return %arg0, %c0_i32 : i32, i32
  }
  func.func @transform_1(%arg0: i32) -> (i32, i32) {
    %c0_i32 = arith.constant 0 : i32
    %c0_i32_0 = arith.constant 0 : i32
    %c0_i32_1 = arith.constant 0 : i32
    return %c0_i32, %c0_i32_0 : i32, i32
  }
  func.func @transform_2(%arg0: i32) -> i32 {
    %c0_i32 = arith.constant 0 : i32
    %c0_i32_0 = arith.constant 0 : i32
    return %c0_i32 : i32
  }
  func.func @transform_3(%arg0: i32) -> (i32, i32) {
    %c0_i32 = arith.constant 0 : i32
    %c0_i32_0 = arith.constant 0 : i32
    %c0_i32_1 = arith.constant 0 : i32
    return %c0_i32, %c0_i32_0 : i32, i32
  }
  func.func @transform_4(%arg0: i32) -> (i32, i32) {
    %c0_i32 = arith.constant 0 : i32
    %c0_i32_0 = arith.constant 0 : i32
    return %arg0, %c0_i32 : i32, i32
  }
}

</mosaic_0001>

<llo_original>
// kernel: tpu_custom_call.1
$region0: #{tpu_custom_call.1}
  #allocation0 [shape = 'u32[]', space=smem, size = 0x4, offset = 0x4, fixed_abs, tag = 'smem constant byte address 0x4 - core index']
  #allocation1 [shape = 'u32[144,128]{1,0:T(1,128)}', space=vmem, size = 0x12000, scoped, tag = 'internal scratch']
  #allocation2 [shape = 'f32[1]{0:T(128)S(6)}', space=smem, size = 0x200, scoped, tag = 'scoped memory for tpu_custom_call.1']
  %s0 = inlined_call_operand.vmem [shape: f32[2,256], index: 0, kind: input, shape index: {}]
  %s1 = inlined_call_operand.vmem [shape: f32[256,8], index: 1, kind: input, shape index: {}]
  %s2 = inlined_call_operand.<no memory space> [shape: f32[1], index: 2, kind: input, shape index: {}]
  %s3 = inlined_call_operand.vmem [shape: f32[9,4], index: 3, kind: input, shape index: {}]
  %s4 = inlined_call_operand.hbm [shape: f32[2,4], index: 4, kind: output, shape index: {}]
  %s5 = sld [smem:[#allocation0]]
  $region26: #{tpu_custom_call.1} parent=0
    _
  %s7 = ssub.s32 1, %s5
  %s8 = scalar_select 0, %s7, %s5
  %9 = sst [smem:[#allocation2]] %s2
  $region1: #{tpu_custom_call.1} parent=0
    #allocation3 [shape = 'u8[1024]{0}', space=vmem, size = 0x400, scoped, tag = 'output window, operand 0, single buffered']
    #allocation4 [shape = 's32[1]{0}', space=sflag, size = 0x4, scoped, tag = 'scoped memory for tpu_custom_call.1']
    %10 = vsyncpa [#allocation4], 0
    // Predicated region
    $region2: #{tpu_custom_call.1} parent=1 // pred_check
      _
    $region3: #{tpu_custom_call.1} parent=1 // pred_check_branch
      %12 = sbr.rel (0) target = $region5
    $region4: #{tpu_custom_call.1} parent=1 // pred_region
      _
    $region5: #{tpu_custom_call.1} parent=1 // pred_fallthru
      _
    // Predicated region
    $region6: #{tpu_custom_call.1} parent=1 // pred_check
      _
    $region7: #{tpu_custom_call.1} parent=1 // pred_check_branch
      %14 = sbr.rel (0) target = $region9
    $region8: #{tpu_custom_call.1} parent=1 // pred_region
      _
    $region9: #{tpu_custom_call.1} parent=1 // pred_fallthru
      _
    // Predicated region
    $region10: #{tpu_custom_call.1} parent=1 // pred_check
      _
    $region11: #{tpu_custom_call.1} parent=1 // pred_check_branch
      %16 = sbr.rel (0) target = $region13
    $region12: #{tpu_custom_call.1} parent=1 // pred_region
      _
    $region13: #{tpu_custom_call.1} parent=1 // pred_fallthru
      _
    // Predicated region
    $region14: #{tpu_custom_call.1} parent=1 // pred_check
      _
    $region15: #{tpu_custom_call.1} parent=1 // pred_check_branch
      %18 = sbr.rel (0) target = $region17
    $region16: #{tpu_custom_call.1} parent=1 // pred_region
      _
    $region17: #{tpu_custom_call.1} parent=1 // pred_fallthru
      _
    %v19 = vld [vmem:[%s0] sm:$0xf]
    %v20 = vld [vmem:[%s1] sm:$0xff]
    %v21 = vld [vmem:[%s1 + $0x8] sm:$0xff]
    %v22 = vld [vmem:[%s1 + $0x10] sm:$0xff]
    %v23 = vld [vmem:[%s1 + $0x18] sm:$0xff]
    %v24 = vld [vmem:[%s1 + $0x20] sm:$0xff]
    %v25 = vld [vmem:[%s1 + $0x28] sm:$0xff]
    %v26 = vld [vmem:[%s1 + $0x30] sm:$0xff]
    %v27 = vld [vmem:[%s1 + $0x38] sm:$0xff]
    %v28 = vld [vmem:[%s1 + $0x40] sm:$0xff]
    %v29 = vld [vmem:[%s1 + $0x48] sm:$0xff]
    %v30 = vld [vmem:[%s1 + $0x50] sm:$0xff]
    %v31 = vld [vmem:[%s1 + $0x58] sm:$0xff]
    %v32 = vld [vmem:[%s1 + $0x60] sm:$0xff]
    %v33 = vld [vmem:[%s1 + $0x68] sm:$0xff]
    %v34 = vld [vmem:[%s1 + $0x70] sm:$0xff]
    %v35 = vld [vmem:[%s1 + $0x78] sm:$0xff]
    %v36 = vld [vmem:[%s1 + $0x80] sm:$0xff]
    %v37 = vld [vmem:[%s1 + $0x88] sm:$0xff]
    %v38 = vld [vmem:[%s1 + $0x90] sm:$0xff]
    %v39 = vld [vmem:[%s1 + $0x98] sm:$0xff]
    %v40 = vld [vmem:[%s1 + $0xa0] sm:$0xff]
    %v41 = vld [vmem:[%s1 + $0xa8] sm:$0xff]
    %v42 = vld [vmem:[%s1 + $0xb0] sm:$0xff]
    %v43 = vld [vmem:[%s1 + $0xb8] sm:$0xff]
    %v44 = vld [vmem:[%s1 + $0xc0] sm:$0xff]
    %v45 = vld [vmem:[%s1 + $0xc8] sm:$0xff]
    %v46 = vld [vmem:[%s1 + $0xd0] sm:$0xff]
    %v47 = vld [vmem:[%s1 + $0xd8] sm:$0xff]
    %v48 = vld [vmem:[%s1 + $0xe0] sm:$0xff]
    %v49 = vld [vmem:[%s1 + $0xe8] sm:$0xff]
    %v50 = vld [vmem:[%s1 + $0xf0] sm:$0xff]
    %v51 = vld [vmem:[%s1 + $0xf8] sm:$0xff]
    %s52 = sld [smem:[#allocation2]]
    %v53 = vstv %s52
    %v56 = vunpack.c.l.s4 1983009808
    %v57 = vunpack.c.0.s8 %v56
    %v58 = vlaneseq
    %v59 = vshrl.u32 %v58, 7
    %v60 = vsub.s32 %v57, %v59
    %v61 = vrot.slane %v19, %v60
    %v62 = vcombine.high %v61, %v61
    %65 = vmatprep.subr.mxu0 0.0
    %66 = vmatpush1.msra.mxu0 %v20
    %67 = vmatprep.subr.mxu0 0.0
    %68 = vmatpush1.msra.mxu0 %v21
    %69 = vmatprep.subr.mxu0 0.0
    %70 = vmatpush1.msra.mxu0 %v22
    %71 = vmatprep.subr.mxu0 0.0
    %72 = vmatpush1.msra.mxu0 %v23
    %73 = vmatprep.subr.mxu0 0.0
    %74 = vmatpush1.msra.mxu0 %v24
    %75 = vmatprep.subr.mxu0 0.0
    %76 = vmatpush1.msra.mxu0 %v25
    %77 = vmatprep.subr.mxu0 0.0
    %78 = vmatpush1.msra.mxu0 %v26
    %79 = vmatprep.subr.mxu0 0.0
    %80 = vmatpush1.msra.mxu0 %v27
    %81 = vmatprep.subr.mxu0 0.0
    %82 = vmatpush1.msra.mxu0 %v28
    %83 = vmatprep.subr.mxu0 0.0
    %84 = vmatpush1.msra.mxu0 %v29
    %85 = vmatprep.subr.mxu0 0.0
    %86 = vmatpush1.msra.mxu0 %v30
    %87 = vmatprep.subr.mxu0 0.0
    %88 = vmatpush1.msra.mxu0 %v31
    %89 = vmatprep.subr.mxu0 0.0
    %90 = vmatpush1.msra.mxu0 %v32
    %91 = vmatprep.subr.mxu0 0.0
    %92 = vmatpush1.msra.mxu0 %v33
    %93 = vmatprep.subr.mxu0 0.0
    %94 = vmatpush1.msra.mxu0 %v34
    %95 = vmatprep.subr.mxu0 0.0
    %96 = vmatpush1.msra.mxu0 %v35
    %97 = vmatprep.subr.mxu0 0.0
    %98 = vmatpush1.msra.mxu0 %v36
    %99 = vmatprep.subr.mxu0 0.0
    %100 = vmatpush1.msra.mxu0 %v37
    %101 = vmatprep.subr.mxu0 0.0
    %102 = vmatpush1.msra.mxu0 %v38
    %103 = vmatprep.subr.mxu0 0.0
    %104 = vmatpush1.msra.mxu0 %v39
    %105 = vmatprep.subr.mxu0 0.0
    %106 = vmatpush1.msra.mxu0 %v40
    %107 = vmatprep.subr.mxu0 0.0
    %108 = vmatpush1.msra.mxu0 %v41
    %109 = vmatprep.subr.mxu0 0.0
    %110 = vmatpush1.msra.mxu0 %v42
    %111 = vmatprep.subr.mxu0 0.0
    %112 = vmatpush1.msra.mxu0 %v43
    %113 = vmatprep.subr.mxu0 0.0
    %114 = vmatpush1.msra.mxu0 %v44
    %115 = vmatprep.subr.mxu0 0.0
    %116 = vmatpush1.msra.mxu0 %v45
    %117 = vmatprep.subr.mxu0 0.0
    %118 = vmatpush1.msra.mxu0 %v46
    %119 = vmatprep.subr.mxu0 0.0
    %120 = vmatpush1.msra.mxu0 %v47
    %121 = vmatprep.subr.mxu0 0.0
    %122 = vmatpush1.msra.mxu0 %v48
    %123 = vmatprep.subr.mxu0 0.0
    %124 = vmatpush1.msra.mxu0 %v49
    %125 = vmatprep.subr.mxu0 0.0
    %126 = vmatpush1.msra.mxu0 %v50
    %127 = vmatprep.subr.mxu0 0.0
    %128 = vmatpush1.msra.mxu0 %v51
    %129 = vmatprep.mubr.f32.mxu0 %v62
    %130 = vmatmul.mubr.f32.gmra.mrb[0].mxu0 %v61
    %v131 = vpop.f32.mrb[0].mxu0
    %v132 = vadd.f32 %v53, %v131
    %v133 = vpop.f32.mrb[0].mxu0
    %134 = vdwg.mxu0
    %v135 = vmax.f32 %v132, 0.0
    %v136 = vld [vmem:[%s3] sm:$0xff]
    %v137 = vld [vmem:[%s3 + $0x8] sm:$0x1]
    %v138 = vlaneseq
    %v139 = vshrl.u32 %v138, 7
    %v140 = vsub.s32 0, %v139
    %v141 = vrot.slane %v137, %v140
    %vm142 = vcmask 64512
    %v144 = vsel %vm142, %v135, 0
    %146 = vmatprep.subr.mxu0 0.0
    %147 = vmatpush1.msra.mxu0 %v136
    %148 = vmatprep.subr.mxu0 0.0
    %149 = vmatpush1.msra.mxu0 0.0
    %150 = vmatprep.subr.mxu0 0.0
    %151 = vmatpush1.msra.mxu0 0.0
    %152 = vmatprep.subr.mxu0 0.0
    %153 = vmatpush1.msra.mxu0 0.0
    %154 = vmatprep.subr.mxu0 0.0
    %155 = vmatpush1.msra.mxu0 0.0
    %156 = vmatprep.subr.mxu0 0.0
    %157 = vmatpush1.msra.mxu0 0.0
    %158 = vmatprep.subr.mxu0 0.0
    %159 = vmatpush1.msra.mxu0 0.0
    %160 = vmatprep.subr.mxu0 0.0
    %161 = vmatpush1.msra.mxu0 0.0
    %162 = vmatprep.subr.mxu0 0.0
    %163 = vmatpush1.msra.mxu0 0.0
    %164 = vmatprep.subr.mxu0 0.0
    %165 = vmatpush1.msra.mxu0 0.0
    %166 = vmatprep.subr.mxu0 0.0
    %167 = vmatpush1.msra.mxu0 0.0
    %168 = vmatprep.subr.mxu0 0.0
    %169 = vmatpush1.msra.mxu0 0.0
    %170 = vmatprep.subr.mxu0 0.0
    %171 = vmatpush1.msra.mxu0 0.0
    %172 = vmatprep.subr.mxu0 0.0
    %173 = vmatpush1.msra.mxu0 0.0
    %174 = vmatprep.subr.mxu0 0.0
    %175 = vmatpush1.msra.mxu0 0.0
    %176 = vmatprep.subr.mxu0 0.0
    %177 = vmatpush1.msra.mxu0 0.0
    %178 = vmatprep.subr.mxu0 0.0
    %179 = vmatpush1.msra.mxu0 0.0
    %180 = vmatprep.subr.mxu0 0.0
    %181 = vmatpush1.msra.mxu0 0.0
    %182 = vmatprep.subr.mxu0 0.0
    %183 = vmatpush1.msra.mxu0 0.0
    %184 = vmatprep.subr.mxu0 0.0
    %185 = vmatpush1.msra.mxu0 0.0
    %186 = vmatprep.subr.mxu0 0.0
    %187 = vmatpush1.msra.mxu0 0.0
    %188 = vmatprep.subr.mxu0 0.0
    %189 = vmatpush1.msra.mxu0 0.0
    %190 = vmatprep.subr.mxu0 0.0
    %191 = vmatpush1.msra.mxu0 0.0
    %192 = vmatprep.subr.mxu0 0.0
    %193 = vmatpush1.msra.mxu0 0.0
    %194 = vmatprep.subr.mxu0 0.0
    %195 = vmatpush1.msra.mxu0 0.0
    %196 = vmatprep.subr.mxu0 0.0
    %197 = vmatpush1.msra.mxu0 0.0
    %198 = vmatprep.subr.mxu0 0.0
    %199 = vmatpush1.msra.mxu0 0.0
    %200 = vmatprep.subr.mxu0 0.0
    %201 = vmatpush1.msra.mxu0 0.0
    %202 = vmatprep.subr.mxu0 0.0
    %203 = vmatpush1.msra.mxu0 0.0
    %204 = vmatprep.subr.mxu0 0.0
    %205 = vmatpush1.msra.mxu0 0.0
    %206 = vmatprep.subr.mxu0 0.0
    %207 = vmatpush1.msra.mxu0 0.0
    %208 = vmatprep.subr.mxu0 0.0
    %209 = vmatpush1.msra.mxu0 0.0
    %210 = vmatprep.mubr.f32.mxu0 0.0
    %211 = vmatmul.mubr.f32.gmra.mrb[0].mxu0 %v144
    %v212 = vpop.f32.mrb[0].mxu0
    %v213 = vadd.f32 %v141, %v212
    %v214 = vpop.f32.mrb[0].mxu0
    %215 = vdwg.mxu0
    %vm216 = vcmask 25600
    %217 = vst.msk [vmem:[#allocation3] sm:$0x3] %vm216, %v213
    // Predicated region
    $region18: #{tpu_custom_call.1} parent=1 // pred_check
      _
    $region19: #{tpu_custom_call.1} parent=1 // pred_check_branch
      %219 = sbr.rel (0) target = $region21
    $region20: #{tpu_custom_call.1} parent=1 // pred_region
      %s221 = ssub.s32 32, 32
      %222 = vsyncadd [#allocation4], %s221
      %s224 = sshll.u32 [#allocation3], 4
      %s225 = int_to_ptr.vmem [resolvable:$true] %s224
      %227 = dma.vmem_to_hbm [thread:$0]  %s225, 32, %s4, [#allocation4]
    $region21: #{tpu_custom_call.1} parent=1 // pred_fallthru
      _
    // Predicated region
    $region22: #{tpu_custom_call.1} parent=1 // pred_check
      _
    $region23: #{tpu_custom_call.1} parent=1 // pred_check_branch
      %229 = sbr.rel (0) target = $region25
    $region24: #{tpu_custom_call.1} parent=1 // pred_region
      %230 = dma.done [#allocation4], 32
    $region25: #{tpu_custom_call.1} parent=1 // pred_fallthru
      _
    %231 = vsyncpa [#allocation4], 1

</llo_original>
